<compile_context>
chip_gen: v7x
topology: tpu7x:2x2x1
jax: 0.10.0
libtpu: 0.0.40
codegen_flags: <defaults>
</compile_context>

<pallas_src>
import functools

import jax
import jax.numpy as jnp
from jax.experimental import pallas as pl
from jax.experimental.pallas import tpu as pltpu

LANES = 128
SUBLANES = 8
ROW_ALIGN = 32            # covers f32 (8,128), bf16 (16,128), int8 (32,128) tiles


def _bce_sum_kernel(x_ref, t_ref, out_ref, *, valid_rows, block_rows,
                    steps_per_shard):
    s = pl.program_id(0)          # parallel shard (v7x megacore axis)
    i = pl.program_id(1)          # reduction step within the shard

    @pl.when(i == 0)
    def _():
        out_ref[...] = jnp.zeros_like(out_ref)

    p = x_ref[...].astype(jnp.float32)
    t = t_ref[...].astype(jnp.float32)

    # PyTorch's BCELoss clamps each log term at -100 (before the multiply, so
    # p==0 / p==1 and zero-padded tails stay finite / contribute exactly 0).
    log_p = jnp.maximum(jnp.log(p), -100.0)
    log_1mp = jnp.maximum(jnp.log(1.0 - p), -100.0)
    # -(t*log_p + (1-t)*log_1mp) == -(t*(log_p - log_1mp) + log_1mp)
    contrib = t * (log_p - log_1mp) + log_1mp            # == -bce

    # Mask rows past the true row count: covers the ragged last block and the
    # duplicated (clamped) block of an uneven shard.  Select does not
    # propagate NaN from the unselected (out-of-bounds garbage) side.
    block_idx = s * steps_per_shard + i
    row = jax.lax.broadcasted_iota(jnp.int32, contrib.shape, 0)
    contrib = jnp.where(block_idx * block_rows + row < valid_rows,
                        contrib, 0.0)

    # Vreg-shaped per-shard accumulator; BCE negation folded into the update.
    out_ref[...] -= contrib.reshape(-1, SUBLANES, LANES).sum(axis=0)[None]


def binary_cross_entropy_loss_2d(inputs, targets, *, size_average=True,
                                 block_rows=8192):
    """Mean (or sum) BCE over probabilities, matching nn.BCELoss semantics."""
    # TODO(synk): optional per-element `weight` rescaling (BCELoss weight arg)
    # is not implemented; the module's default construction (weight=None) is
    # fully covered.
    n_elems = inputs.size

    x = jnp.ravel(inputs)                 # native dtype: no wrapper astype copy
    t = jnp.ravel(targets)

    # Lane-dense [rows, 128] view.  Only pad to the 128-lane / 32-row-minimum
    # boundary; no-op (zero copies) for aligned sizes, tiny otherwise.
    rows = max(pl.cdiv(n_elems, LANES), ROW_ALIGN)
    padded_n = rows * LANES
    if padded_n != n_elems:
        pad = padded_n - n_elems
        # p=0, t=0 padding contributes exactly zero to the BCE sum.
        x = jnp.pad(x, (0, pad))
        t = jnp.pad(t, (0, pad))
    x2 = x.reshape(rows, LANES)
    t2 = t.reshape(rows, LANES)

    # Block height: as tall as a conservative double-buffered-input VMEM budget
    # allows (safe on v5e/v6e/v7x), multiple of 32, never taller than the array.
    bytes_per_row = LANES * (x2.dtype.itemsize + t2.dtype.itemsize)
    vmem_budget = 32 << 20                          # 2 inputs x 2 buffers
    max_br = max(ROW_ALIGN,
                 (vmem_budget // (2 * bytes_per_row)) // ROW_ALIGN * ROW_ALIGN)
    br = min(block_rows, max_br, rows)
    br = max(ROW_ALIGN, (br // ROW_ALIGN) * ROW_ALIGN)

    nblocks = pl.cdiv(rows, br)
    # Leading "parallel" axis so both v7x TensorCores get a shard; a short
    # sequential loop (harmless) on single-core v5e/v6e.
    num_shards = 2 if nblocks >= 8 else 1
    steps = pl.cdiv(nblocks, num_shards)
    last_block = nblocks - 1

    def in_index(s, i, steps=steps, last=last_block):
        # Clamp so an uneven shard never issues a fully out-of-bounds DMA; the
        # duplicated block is zeroed by the in-kernel row mask.
        return (jnp.minimum(s * steps + i, last), 0)

    kernel = functools.partial(_bce_sum_kernel, valid_rows=rows,
                               block_rows=br, steps_per_shard=steps)

    vmem_limit = max(int(2 * br * bytes_per_row + (4 << 20)), 16 << 20)

    partials = pl.pallas_call(
        kernel,
        out_shape=jax.ShapeDtypeStruct((num_shards, SUBLANES, LANES),
                                       jnp.float32),
        grid_spec=pltpu.PrefetchScalarGridSpec(
            num_scalar_prefetch=0,
            grid=(num_shards, steps),
            in_specs=[
                pl.BlockSpec((br, LANES), in_index),
                pl.BlockSpec((br, LANES), in_index),
            ],
            out_specs=pl.BlockSpec((1, SUBLANES, LANES),
                                   lambda s, i: (s, 0, 0)),
        ),
        compiler_params=pltpu.CompilerParams(
            dimension_semantics=("parallel", "arbitrary"),
            vmem_limit_bytes=vmem_limit),
        cost_estimate=pl.CostEstimate(
            flops=6 * n_elems,
            transcendentals=2 * n_elems,
            bytes_accessed=n_elems * (x2.dtype.itemsize + t2.dtype.itemsize)
            + num_shards * SUBLANES * LANES * 4),
    )(x2, t2)

    total = jnp.sum(partials)
    if size_average:
        return total / jnp.float32(n_elems)
    return total


def _reference(inputs, targets):
    """Pure-JAX reference mirroring PyTorch nn.BCELoss (mean reduction)."""
    x = inputs.astype(jnp.float32)
    t = targets.astype(jnp.float32)
    log_p = jnp.maximum(jnp.log(x), -100.0)
    log_1mp = jnp.maximum(jnp.log(1.0 - x), -100.0)
    return jnp.mean(-(t * log_p + (1.0 - t) * log_1mp))


if __name__ == "__main__":
    key = jax.random.PRNGKey(0)

    def make_case(k, shape):
        k1, k2 = jax.random.split(k)
        p = jax.random.uniform(k1, shape, jnp.float32,
                               minval=1e-4, maxval=1.0 - 1e-4)  # probabilities
        t = (jax.random.uniform(k2, shape) > 0.5).astype(jnp.float32)
        return p, t

    k0, k1, k2 = jax.random.split(key, 3)

    # Primary case: NCHW batch=2, channels=4, 16x16 spatial.
    inputs, targets = make_case(k0, (2, 4, 16, 16))
    loss = jax.block_until_ready(binary_cross_entropy_loss_2d(inputs, targets))
    ref = _reference(inputs, targets)
    assert jnp.allclose(loss, ref, rtol=2e-5, atol=1e-6), (loss, ref)

    # Ragged case: exercises the 128-lane pad / minimum-rows path.
    inputs, targets = make_case(k1, (2, 3, 17, 19))
    loss = jax.block_until_ready(binary_cross_entropy_loss_2d(inputs, targets))
    ref = _reference(inputs, targets)
    assert jnp.allclose(loss, ref, rtol=1e-4, atol=1e-6), (loss, ref)

    # Multi-block, two-shard ("parallel") case with an uneven shard count:
    # exercises the clamped duplicate block, the partial tail block, and the
    # in-kernel row masking (block_rows=32 forces 9 blocks over 2 shards).
    inputs, targets = make_case(k2, (2, 4, 64, 68))
    loss = jax.block_until_ready(
        binary_cross_entropy_loss_2d(inputs, targets, block_rows=32))
    ref = _reference(inputs, targets)
    assert jnp.allclose(loss, ref, rtol=1e-4, atol=1e-6), (loss, ref)

    print("KERNEL_OK")
</pallas_src>

<mosaic_0001>
module attributes {stable_mosaic.version = 11 : i64} {
  func.func @_bce_sum_kernel(%arg0: i32, %arg1: i32, %arg2: memref<32x128xf32, #tpu.memory_space<vmem>>, %arg3: memref<32x128xf32, #tpu.memory_space<vmem>>, %arg4: memref<1x8x128xf32, #tpu.memory_space<vmem>>) attributes {dimension_semantics = [#tpu.dimension_semantics<parallel>, #tpu.dimension_semantics<arbitrary>], iteration_bounds = array<i64: 1, 1>, scalar_prefetch = 0 : i64, scratch_operands = 0 : i64, tpu.core_type = #tpu.core_type<tc>, window_params = [{transform_indices = @transform_0, window_bounds = array<i64: 32, 128>}, {transform_indices = @transform_1, window_bounds = array<i64: 32, 128>}, {transform_indices = @transform_2, window_bounds = array<i64: 1, 8, 128>}]} {
    %c0_i32 = arith.constant 0 : i32
    %0 = arith.cmpi eq, %arg1, %c0_i32 : i32
    %1 = arith.extui %0 : i1 to i32
    %c0_i32_0 = arith.constant 0 : i32
    %2 = arith.cmpi ne, %1, %c0_i32_0 : i32
    scf.if %2 {
      %cst_15 = arith.constant 0.000000e+00 : f32
      %32 = vector.broadcast %cst_15 : f32 to vector<1x8x128xf32>
      %c0_16 = arith.constant 0 : index
      %c0_17 = arith.constant 0 : index
      %c0_18 = arith.constant 0 : index
      %33 = vector.load %arg4[%c0_16, %c0_17, %c0_18] : memref<1x8x128xf32, #tpu.memory_space<vmem>>, vector<1x8x128xf32>
      tpu.vector_store %arg4[%c0_16, %c0_17, %c0_18], %32 {strides = array<i32>} : memref<1x8x128xf32, #tpu.memory_space<vmem>>, vector<1x8x128xf32>,
    } else {
    }
    %c0 = arith.constant 0 : index
    %c0_1 = arith.constant 0 : index
    %3 = vector.load %arg2[%c0, %c0_1] : memref<32x128xf32, #tpu.memory_space<vmem>>, vector<32x128xf32>
    %c0_2 = arith.constant 0 : index
    %c0_3 = arith.constant 0 : index
    %4 = vector.load %arg3[%c0_2, %c0_3] : memref<32x128xf32, #tpu.memory_space<vmem>>, vector<32x128xf32>
    %5 = math.log %3 : vector<32x128xf32>
    %cst = arith.constant -1.000000e+02 : f32
    %6 = vector.broadcast %cst : f32 to vector<32x128xf32>
    %7 = arith.maximumf %5, %6 : vector<32x128xf32>
    %cst_4 = arith.constant 1.000000e+00 : f32
    %8 = vector.broadcast %cst_4 : f32 to vector<32x128xf32>
    %9 = arith.subf %8, %3 : vector<32x128xf32>
    %10 = math.log %9 : vector<32x128xf32>
    %cst_5 = arith.constant -1.000000e+02 : f32
    %11 = vector.broadcast %cst_5 : f32 to vector<32x128xf32>
    %12 = arith.maximumf %10, %11 : vector<32x128xf32>
    %13 = arith.subf %7, %12 : vector<32x128xf32>
    %14 = arith.mulf %4, %13 : vector<32x128xf32>
    %15 = arith.addf %14, %12 : vector<32x128xf32>
    %c1_i32 = arith.constant 1 : i32
    %16 = arith.muli %arg0, %c1_i32 : i32
    %17 = arith.addi %16, %arg1 : i32
    %18 = tpu.iota {dimensions = array<i32: 0>} : vector<32x128xi32>
    %c32_i32 = arith.constant 32 : i32
    %19 = arith.muli %17, %c32_i32 : i32
    %20 = vector.broadcast %19 : i32 to vector<32x128xi32>
    %21 = arith.addi %20, %18 : vector<32x128xi32>
    %c32_i32_6 = arith.constant 32 : i32
    %22 = vector.broadcast %c32_i32_6 : i32 to vector<32x128xi32>
    %23 = arith.cmpi slt, %21, %22 : vector<32x128xi32>
    %cst_7 = arith.constant 0.000000e+00 : f32
    %24 = vector.broadcast %cst_7 : f32 to vector<32x128xf32>
    %25 = arith.select %23, %15, %24 : vector<32x128xi1>, vector<32x128xf32>
    %c0_8 = arith.constant 0 : index
    %c0_9 = arith.constant 0 : index
    %c0_10 = arith.constant 0 : index
    %26 = vector.load %arg4[%c0_8, %c0_9, %c0_10] : memref<1x8x128xf32, #tpu.memory_space<vmem>>, vector<1x8x128xf32>
    %27 = vector.shape_cast %25 : vector<32x128xf32> to vector<4x8x128xf32>
    %cst_11 = arith.constant dense<0.000000e+00> : vector<8x128xf32>
    %28 = vector.multi_reduction <add>, %27, %cst_11 [0] : vector<4x8x128xf32> to vector<8x128xf32>
    %29 = vector.shape_cast %28 : vector<8x128xf32> to vector<1x8x128xf32>
    %30 = arith.subf %26, %29 : vector<1x8x128xf32>
    %c0_12 = arith.constant 0 : index
    %c0_13 = arith.constant 0 : index
    %c0_14 = arith.constant 0 : index
    %31 = vector.load %arg4[%c0_12, %c0_13, %c0_14] : memref<1x8x128xf32, #tpu.memory_space<vmem>>, vector<1x8x128xf32>
    tpu.vector_store %arg4[%c0_12, %c0_13, %c0_14], %30 {strides = array<i32>} : memref<1x8x128xf32, #tpu.memory_space<vmem>>, vector<1x8x128xf32>,
    return
  }
  func.func @transform_0(%arg0: i32, %arg1: i32) -> (i32, i32) {
    %c1_i32 = arith.constant 1 : i32
    %0 = arith.muli %arg0, %c1_i32 : i32
    %1 = arith.addi %0, %arg1 : i32
    %c0_i32 = arith.constant 0 : i32
    %2 = arith.minsi %1, %c0_i32 : i32
    %c0_i32_0 = arith.constant 0 : i32
    %c0_i32_1 = arith.constant 0 : i32
    return %2, %c0_i32_0 : i32, i32
  }
  func.func @transform_1(%arg0: i32, %arg1: i32) -> (i32, i32) {
    %c1_i32 = arith.constant 1 : i32
    %0 = arith.muli %arg0, %c1_i32 : i32
    %1 = arith.addi %0, %arg1 : i32
    %c0_i32 = arith.constant 0 : i32
    %2 = arith.minsi %1, %c0_i32 : i32
    %c0_i32_0 = arith.constant 0 : i32
    %c0_i32_1 = arith.constant 0 : i32
    return %2, %c0_i32_0 : i32, i32
  }
  func.func @transform_2(%arg0: i32, %arg1: i32) -> (i32, i32, i32) {
    %c0_i32 = arith.constant 0 : i32
    %c0_i32_0 = arith.constant 0 : i32
    %c0_i32_1 = arith.constant 0 : i32
    return %arg0, %c0_i32, %c0_i32_0 : i32, i32, i32
  }
}

</mosaic_0001>

<llo_original>
// kernel: tpu_custom_call.1
$region0: #{tpu_custom_call.1}
  #allocation0 [shape = 'u32[]', space=smem, size = 0x4, offset = 0x4, fixed_abs, tag = 'smem constant byte address 0x4 - core index']
  #allocation1 [shape = 'u32[144,128]{1,0:T(1,128)}', space=vmem, size = 0x12000, scoped, tag = 'internal scratch']
  %s0 = inlined_call_operand.hbm [shape: f32[32,128], index: 0, kind: input, shape index: {}]
  %s1 = inlined_call_operand.hbm [shape: f32[32,128], index: 1, kind: input, shape index: {}]
  %s2 = inlined_call_operand.hbm [shape: f32[1,8,128], index: 2, kind: output, shape index: {}]
  %s3 = sld [smem:[#allocation0]]
  $region30: #{tpu_custom_call.1} parent=0
    _
  %s5 = ssub.s32 1, %s3
  %s6 = scalar_select 0, %s5, %s3
  $region1: #{tpu_custom_call.1} parent=0
    #allocation2 [shape = 'u8[16384]{0}', space=vmem, size = 0x4000, scoped, tag = 'input window, operand 0, single buffered']
    #allocation3 [shape = 's32[1]{0}', space=sflag, size = 0x4, scoped, tag = 'scoped memory for tpu_custom_call.1']
    #allocation4 [shape = 's32[1]{0}', space=sflag, size = 0x4, scoped, tag = 'scoped memory for tpu_custom_call.1']
    #allocation5 [shape = 'u8[16384]{0}', space=vmem, size = 0x4000, scoped, tag = 'input window, operand 1, single buffered']
    #allocation6 [shape = 's32[1]{0}', space=sflag, size = 0x4, scoped, tag = 'scoped memory for tpu_custom_call.1']
    #allocation7 [shape = 'u8[4096]{0}', space=vmem, size = 0x1000, scoped, tag = 'output window, operand 0, single buffered']
    %7 = vsyncpa [#allocation3], 0
    %8 = vsyncpa [#allocation6], 0
    %9 = vsyncpa [#allocation4], 0
    // Predicated region
    $region2: #{tpu_custom_call.1} parent=1 // pred_check
      _
    $region3: #{tpu_custom_call.1} parent=1 // pred_check_branch
      %11 = sbr.rel (0) target = $region5
    $region4: #{tpu_custom_call.1} parent=1 // pred_region
      %s12 = sadd.s32 0, 0
      %p13 = scmp.lt.s32.totalorder %s12, 0
      %s14 = scalar_select %p13, %s12, 0
      %s15 = smul.u32 4, %s14
      %s17 = ssub.s32 512, 512
      %18 = vsyncadd [#allocation3], %s17
      %s19 = smul.addr %s15, 128
      %s20 = scalar_lea.hbm %s0, %s19
      %s21 = sshll.u32 [#allocation2], 4
      %s22 = int_to_ptr.vmem [resolvable:$true] %s21
      %27 = dma.hbm_to_vmem [thread:$0]  %s20, 512, %s22, [#allocation3], 128, 128, 8
    $region5: #{tpu_custom_call.1} parent=1 // pred_fallthru
      _
    // Predicated region
    $region6: #{tpu_custom_call.1} parent=1 // pred_check
      _
    $region7: #{tpu_custom_call.1} parent=1 // pred_check_branch
      %29 = sbr.rel (0) target = $region9
    $region8: #{tpu_custom_call.1} parent=1 // pred_region
      %s30 = sadd.s32 0, 0
      %p31 = scmp.lt.s32.totalorder %s30, 0
      %s32 = scalar_select %p31, %s30, 0
      %s33 = smul.u32 4, %s32
      %s35 = ssub.s32 512, 512
      %36 = vsyncadd [#allocation6], %s35
      %s37 = smul.addr %s33, 128
      %s38 = scalar_lea.hbm %s1, %s37
      %s39 = sshll.u32 [#allocation5], 4
      %s40 = int_to_ptr.vmem [resolvable:$true] %s39
      %45 = dma.hbm_to_vmem [thread:$0]  %s38, 512, %s40, [#allocation6], 128, 128, 8
    $region9: #{tpu_custom_call.1} parent=1 // pred_fallthru
      _
    // Predicated region
    $region10: #{tpu_custom_call.1} parent=1 // pred_check
      _
    $region11: #{tpu_custom_call.1} parent=1 // pred_check_branch
      %47 = sbr.rel (0) target = $region13
    $region12: #{tpu_custom_call.1} parent=1 // pred_region
      %48 = dma.done [#allocation3], 512
    $region13: #{tpu_custom_call.1} parent=1 // pred_fallthru
      _
    // Predicated region
    $region14: #{tpu_custom_call.1} parent=1 // pred_check
      _
    $region15: #{tpu_custom_call.1} parent=1 // pred_check_branch
      %50 = sbr.rel (0) target = $region17
    $region16: #{tpu_custom_call.1} parent=1 // pred_region
      %51 = dma.done [#allocation6], 512
    $region17: #{tpu_custom_call.1} parent=1 // pred_fallthru
      _
    %s52 = sadd.s32 0, 0
    %p53 = scmp.lt.s32.totalorder %s52, 0
    %s54 = scalar_select %p53, %s52, 0
    %s55 = smul.u32 4, %s54
    %s56 = sadd.s32 0, 0
    %p57 = scmp.lt.s32.totalorder %s56, 0
    %s58 = scalar_select %p57, %s56, 0
    %s59 = smul.u32 4, %s58
    %p60 = scmp.eq.s32.totalorder 0, 0
    // Predicated region
    $region18: #{tpu_custom_call.1} parent=1 // pred_check
      %p61 = pneg %p60
    $region19: #{tpu_custom_call.1} parent=1 // pred_check_branch
      %63 = sbr.rel (%p61) target = $region21
    $region20: #{tpu_custom_call.1} parent=1 // pred_region
      %64 = vst [vmem:[#allocation7] sm:$0xff] 0.0
    $region21: #{tpu_custom_call.1} parent=1 // pred_fallthru
      _
    %v65 = vld [vmem:[#allocation2] sm:$0xff]
    %v66 = vld [vmem:[#allocation2 + $0x8] sm:$0xff]
    %v67 = vld [vmem:[#allocation2 + $0x10] sm:$0xff]
    %v68 = vld [vmem:[#allocation2 + $0x18] sm:$0xff]
    %v69 = vld [vmem:[#allocation5] sm:$0xff]
    %v70 = vld [vmem:[#allocation5 + $0x8] sm:$0xff]
    %v71 = vld [vmem:[#allocation5 + $0x10] sm:$0xff]
    %v72 = vld [vmem:[#allocation5 + $0x18] sm:$0xff]
    %v73 = vlog2.pop %v65
    %v74 = vmul.f32 %v73, 0.6931472
    %v75 = vlog2.pop %v66
    %v76 = vmul.f32 %v75, 0.6931472
    %v77 = vlog2.pop %v67
    %v78 = vmul.f32 %v77, 0.6931472
    %v79 = vlog2.pop %v68
    %v80 = vmul.f32 %v79, 0.6931472
    %v81 = vmax.f32 %v74, -100.0
    %v82 = vmax.f32 %v76, -100.0
    %v83 = vmax.f32 %v78, -100.0
    %v84 = vmax.f32 %v80, -100.0
    %v85 = vsub.f32 1.0, %v65
    %v86 = vsub.f32 1.0, %v66
    %v87 = vsub.f32 1.0, %v67
    %v88 = vsub.f32 1.0, %v68
    %v89 = vlog2.pop %v85
    %v90 = vmul.f32 %v89, 0.6931472
    %v91 = vlog2.pop %v86
    %v92 = vmul.f32 %v91, 0.6931472
    %v93 = vlog2.pop %v87
    %v94 = vmul.f32 %v93, 0.6931472
    %v95 = vlog2.pop %v88
    %v96 = vmul.f32 %v95, 0.6931472
    %v97 = vmax.f32 %v90, -100.0
    %v98 = vmax.f32 %v92, -100.0
    %v99 = vmax.f32 %v94, -100.0
    %v100 = vmax.f32 %v96, -100.0
    %v101 = vsub.f32 %v81, %v97
    %v102 = vsub.f32 %v82, %v98
    %v103 = vsub.f32 %v83, %v99
    %v104 = vsub.f32 %v84, %v100
    %v105 = vmul.f32 %v69, %v101
    %v106 = vmul.f32 %v70, %v102
    %v107 = vmul.f32 %v71, %v103
    %v108 = vmul.f32 %v72, %v104
    %v109 = vadd.f32 %v105, %v97
    %v110 = vadd.f32 %v106, %v98
    %v111 = vadd.f32 %v107, %v99
    %v112 = vadd.f32 %v108, %v100
    %s113 = sadd.s32 0, 0
    %v114 = vlaneseq
    %v115 = vshrl.u32 %v114, 7
    %v116 = vadd.s32 %v115, 8
    %v117 = vadd.s32 %v115, 16
    %v118 = vadd.s32 %v115, 24
    %s119 = smul.u32 %s113, 32
    %v120 = vstv %s119
    %v121 = vadd.s32 %v120, %v115
    %v122 = vadd.s32 %v120, %v116
    %v123 = vadd.s32 %v120, %v117
    %v124 = vadd.s32 %v120, %v118
    %vm125 = vcmp.lt.s32.totalorder %v121, 32
    %vm126 = vcmp.lt.s32.totalorder %v122, 32
    %vm127 = vcmp.lt.s32.totalorder %v123, 32
    %vm128 = vcmp.lt.s32.totalorder %v124, 32
    %v129 = vsel %vm125, %v109, 0.0
    %v130 = vsel %vm126, %v110, 0.0
    %v131 = vsel %vm127, %v111, 0.0
    %v132 = vsel %vm128, %v112, 0.0
    %v133 = vld [vmem:[#allocation7] sm:$0xff]
    %v134 = vadd.f32 %v129, %v130
    %v135 = vadd.f32 %v134, %v131
    %v136 = vadd.f32 %v135, %v132
    %v137 = vsub.f32 %v133, %v136
    %138 = vst [vmem:[#allocation7] sm:$0xff] %v137
    // Predicated region
    $region22: #{tpu_custom_call.1} parent=1 // pred_check
      _
    $region23: #{tpu_custom_call.1} parent=1 // pred_check_branch
      %140 = sbr.rel (0) target = $region25
    $region24: #{tpu_custom_call.1} parent=1 // pred_region
      %s142 = ssub.s32 128, 128
      %143 = vsyncadd [#allocation4], %s142
      %s145 = sshll.u32 [#allocation7], 4
      %s146 = int_to_ptr.vmem [resolvable:$true] %s145
      %148 = dma.vmem_to_hbm [thread:$0]  %s146, 128, %s2, [#allocation4]
    $region25: #{tpu_custom_call.1} parent=1 // pred_fallthru
      _
    // Predicated region
    $region26: #{tpu_custom_call.1} parent=1 // pred_check
      _
    $region27: #{tpu_custom_call.1} parent=1 // pred_check_branch
      %150 = sbr.rel (0) target = $region29
    $region28: #{tpu_custom_call.1} parent=1 // pred_region
      %151 = dma.done [#allocation4], 128
    $region29: #{tpu_custom_call.1} parent=1 // pred_fallthru
      _
    %152 = vsyncpa [#allocation3], 1
    %153 = vsyncpa [#allocation6], 1
    %154 = vsyncpa [#allocation4], 1

</llo_original>
